<compile_context>
chip_gen: v7x
topology: tpu7x:2x2x1
jax: 0.10.0
libtpu: 0.0.40
codegen_flags: <defaults>
</compile_context>

<pallas_src>
import functools

import jax
import jax.numpy as jnp
from jax.experimental import pallas as pl
from jax.experimental.pallas import tpu as pltpu


def _cdiv(a, b):
    return (a + b - 1) // b


def _round_up(x, m):
    return _cdiv(x, m) * m


def _vmem_budget_bytes():
    """~85% of per-core physical VMEM; conservative 64 MiB (v7x) fallback."""
    try:
        cap = int(pltpu.get_tpu_info().vmem_capacity_bytes)
    except Exception:  # off-TPU tracing / older runtimes
        cap = 64 * 1024 * 1024
    return int(0.85 * cap)


def _patch_embed_kernel(p_ref, w_ref, b_ref, o_ref):
    # p_ref: (tm, Kp) compute-dtype patch rows; w_ref: (Kp, Ep); b_ref: (1, Ep) f32.
    acc = jnp.dot(p_ref[...], w_ref[...], preferred_element_type=jnp.float32)
    o_ref[...] = (acc + b_ref[...]).astype(o_ref.dtype)


def patch_embed_matmul(patches, weight_ke, bias, *, tm=1024,
                       out_dtype=jnp.float32, compute_dtype=jnp.bfloat16):
    """patches: (M, K), weight_ke: (K, E), bias: (E,) -> (M, E) in out_dtype."""
    M, K = patches.shape
    Kw, E = weight_ke.shape
    assert Kw == K

    cdt = jnp.dtype(compute_dtype)
    odt = jnp.dtype(out_dtype)
    c_bytes = cdt.itemsize
    o_bytes = odt.itemsize

    # Lane-dense / full-MXU padding of the contraction (K) and output (E) axes.
    Kp = _round_up(K, 128)
    Ep = _round_up(E, 128)

    # ---- M tiling: budget-aware, balanced, megacore-friendly ----------------
    ROW = 16 if c_bytes <= 2 else 8          # bf16 sublane pack
    budget = _vmem_budget_bytes()
    # Resident weight + bias (counted double-buffered: constant index maps mean
    # a single DMA, but the pipeline may still allocate two buffers).
    resident = 2 * (Kp * Ep * c_bytes + Ep * 4)
    headroom = 2 << 20                       # compiler scratch / internal bufs

    def vmem_est(rows):
        # Double-buffered patch/out tiles + resident weight/bias + headroom.
        return 2 * rows * (Kp * c_bytes + Ep * o_bytes) + resident + headroom

    tm = max(ROW, _round_up(int(tm), ROW))
    # Shrink the tile (never the limit) if the estimate exceeds the budget.
    while tm > ROW and vmem_est(tm) > budget:
        tm = max(ROW, _round_up(tm // 2, ROW))

    n_tiles = _cdiv(M, tm)
    if n_tiles > 1 and n_tiles % 2:
        n_tiles += 1                         # even split across v7x's 2 TCs
    tm_eff = _round_up(_cdiv(M, n_tiles), ROW)   # <= tm, minimal zero rows
    M_pad = n_tiles * tm_eff

    # ---- operand prep --------------------------------------------------------
    p = patches.astype(cdt)
    if (M_pad != M) or (Kp != K):
        p = jnp.pad(p, ((0, M_pad - M), (0, Kp - K)))
    w = weight_ke.astype(cdt)
    if (Kp != K) or (Ep != E):
        w = jnp.pad(w, ((0, Kp - K), (0, Ep - E)))
    b2 = bias.astype(jnp.float32).reshape(1, E)   # bias add stays f32 (v5e VPU)
    if Ep != E:
        b2 = jnp.pad(b2, ((0, 0), (0, Ep - E)))

    cost = pl.CostEstimate(
        flops=2 * M_pad * Kp * Ep,
        transcendentals=0,
        bytes_accessed=(M_pad * Kp * c_bytes + Kp * Ep * c_bytes + Ep * 4
                        + M_pad * Ep * o_bytes),
    )

    vmem_limit = int(min(max(vmem_est(tm_eff), 32 * 1024 * 1024), budget))

    out = pl.pallas_call(
        _patch_embed_kernel,
        out_shape=jax.ShapeDtypeStruct((M_pad, Ep), odt),
        grid_spec=pltpu.PrefetchScalarGridSpec(
            num_scalar_prefetch=0,
            grid=(n_tiles,),
            in_specs=[
                pl.BlockSpec((tm_eff, Kp), lambda i: (i, 0)),
                pl.BlockSpec((Kp, Ep), lambda i: (0, 0)),   # weight resident in VMEM
                pl.BlockSpec((1, Ep), lambda i: (0, 0)),    # bias resident in VMEM
            ],
            out_specs=pl.BlockSpec((tm_eff, Ep), lambda i: (i, 0)),
        ),
        compiler_params=pltpu.CompilerParams(
            dimension_semantics=("parallel",),   # shard M tiles across TensorCores
            vmem_limit_bytes=vmem_limit,
        ),
        cost_estimate=cost,
    )(p, w, b2)

    return out[:M, :E]


@functools.partial(
    jax.jit, static_argnames=("patch_size", "tm", "out_dtype", "compute_dtype"))
def patch_embedding_forward(x, conv_weight, conv_bias, patch_size=16, tm=1024,
                            out_dtype=None, compute_dtype=jnp.bfloat16):
    """x: (B, C, H, W) NCHW; conv_weight: (E, C, P, P); conv_bias: (E,).

    Returns (B, num_patches, E), matching PyTorch PatchEmbedding.forward.
    Pass out_dtype=jnp.bfloat16 when the downstream trunk runs in bf16 to halve
    the kernel's output HBM traffic; default preserves x.dtype.
    """
    B, C, H, W = x.shape
    E = conv_weight.shape[0]
    P = patch_size
    assert H % P == 0 and W % P == 0, "Input image size must be divisible by patch size"
    Hp, Wp = H // P, W // P
    Np = Hp * Wp
    K = C * P * P
    odt = x.dtype if out_dtype is None else out_dtype

    # Cast to the (narrow) compute dtype *before* the patch gather to halve
    # that pass's HBM traffic.
    xb = x.astype(compute_dtype)
    patches = xb.reshape(B, C, Hp, P, Wp, P)
    patches = patches.transpose(0, 2, 4, 1, 3, 5)   # (B, Hp, Wp, C, P, P)
    patches = patches.reshape(B * Np, K)            # K ordered as (c, kh, kw)

    # Conv weight (E, C, P, P) -> (K, E), same K ordering as the patches.
    w_ke = conv_weight.reshape(E, K).T

    out = patch_embed_matmul(patches, w_ke, conv_bias, tm=tm,
                             out_dtype=odt, compute_dtype=compute_dtype)
    return out.reshape(B, Np, E)


if __name__ == "__main__":
    # Small shapes consistent with the module.
    B, C, H, W = 2, 4, 16, 16
    P = 8            # patch size (forward requires H % P == 0)
    E = 32           # embedding_dim

    key = jax.random.PRNGKey(0)
    kx, kw, kb = jax.random.split(key, 3)

    x = jax.random.normal(kx, (B, C, H, W), dtype=jnp.float32)
    # Deterministic synthetic parameters mimicking Conv2d param shapes.
    conv_weight = jax.random.normal(kw, (E, C, P, P), dtype=jnp.float32) * 0.02
    conv_bias = jax.random.normal(kb, (E,), dtype=jnp.float32) * 0.02

    out = patch_embedding_forward(x, conv_weight, conv_bias, patch_size=P)
    out = jax.block_until_ready(out)

    # Reference: lax conv with the same semantics as PyTorch Conv2d (NCHW), f32.
    ref = jax.lax.conv_general_dilated(
        x, conv_weight, window_strides=(P, P), padding="VALID",
        dimension_numbers=("NCHW", "OIHW", "NCHW"),
    ) + conv_bias.reshape(1, E, 1, 1)
    ref = ref.reshape(B, E, -1).transpose(0, 2, 1)

    assert out.shape == (B, (H // P) * (W // P), E)
    # bf16 operands with f32 accumulation -> loose-but-tight-enough tolerance.
    assert jnp.allclose(out, ref, atol=2e-2, rtol=2e-2), float(jnp.max(jnp.abs(out - ref)))
    print("KERNEL_OK")
</pallas_src>

<mosaic_0001>
module attributes {stable_mosaic.version = 11 : i64} {
  func.func @_patch_embed_kernel(%arg0: i32, %arg1: memref<16x256xbf16, #tpu.memory_space<vmem>>, %arg2: memref<256x128xbf16, #tpu.memory_space<vmem>>, %arg3: memref<1x128xf32, #tpu.memory_space<vmem>>, %arg4: memref<16x128xf32, #tpu.memory_space<vmem>>) attributes {dimension_semantics = [#tpu.dimension_semantics<parallel>], iteration_bounds = array<i64: 1>, scalar_prefetch = 0 : i64, scratch_operands = 0 : i64, tpu.core_type = #tpu.core_type<tc>, window_params = [{transform_indices = @transform_0, window_bounds = array<i64: 16, 256>}, {pipeline_mode = #tpu.pipeline_mode<synchronous>, transform_indices = @transform_1, window_bounds = array<i64: 256, 128>}, {pipeline_mode = #tpu.pipeline_mode<synchronous>, transform_indices = @transform_2, window_bounds = array<i64: 1, 128>}, {transform_indices = @transform_3, window_bounds = array<i64: 16, 128>}]} {
    %c0 = arith.constant 0 : index
    %c0_0 = arith.constant 0 : index
    %0 = vector.load %arg1[%c0, %c0_0] : memref<16x256xbf16, #tpu.memory_space<vmem>>, vector<16x256xbf16>
    %c0_1 = arith.constant 0 : index
    %c0_2 = arith.constant 0 : index
    %1 = vector.load %arg2[%c0_1, %c0_2] : memref<256x128xbf16, #tpu.memory_space<vmem>>, vector<256x128xbf16>
    %cst = arith.constant dense<0.000000e+00> : vector<16x128xf32>
    %2 = tpu.matmul %0, %1, %cst {dimension_numbers = #tpu.dot_dimension_numbers<[1], [0], [0], [1], [0, 0, 1, 1], [], []>} : vector<16x256xbf16>, vector<256x128xbf16>, vector<16x128xf32> -> vector<16x128xf32>
    %c0_3 = arith.constant 0 : index
    %c0_4 = arith.constant 0 : index
    %3 = vector.load %arg3[%c0_3, %c0_4] : memref<1x128xf32, #tpu.memory_space<vmem>>, vector<1x128xf32>
    %4 = vector.broadcast %3 : vector<1x128xf32> to vector<16x128xf32>
    %5 = arith.addf %2, %4 : vector<16x128xf32>
    %c0_5 = arith.constant 0 : index
    %c0_6 = arith.constant 0 : index
    %6 = vector.load %arg4[%c0_5, %c0_6] : memref<16x128xf32, #tpu.memory_space<vmem>>, vector<16x128xf32>
    tpu.vector_store %arg4[%c0_5, %c0_6], %5 {strides = array<i32>} : memref<16x128xf32, #tpu.memory_space<vmem>>, vector<16x128xf32>,
    return
  }
  func.func @transform_0(%arg0: i32) -> (i32, i32) {
    %c0_i32 = arith.constant 0 : i32
    %c0_i32_0 = arith.constant 0 : i32
    return %arg0, %c0_i32 : i32, i32
  }
  func.func @transform_1(%arg0: i32) -> (i32, i32) {
    %c0_i32 = arith.constant 0 : i32
    %c0_i32_0 = arith.constant 0 : i32
    %c0_i32_1 = arith.constant 0 : i32
    return %c0_i32, %c0_i32_0 : i32, i32
  }
  func.func @transform_2(%arg0: i32) -> (i32, i32) {
    %c0_i32 = arith.constant 0 : i32
    %c0_i32_0 = arith.constant 0 : i32
    %c0_i32_1 = arith.constant 0 : i32
    return %c0_i32, %c0_i32_0 : i32, i32
  }
  func.func @transform_3(%arg0: i32) -> (i32, i32) {
    %c0_i32 = arith.constant 0 : i32
    %c0_i32_0 = arith.constant 0 : i32
    return %arg0, %c0_i32 : i32, i32
  }
}

</mosaic_0001>

<llo_original>
// kernel: patch_embedding_forward.1
$region0: #{patch_embedding_forward.1}
  #allocation0 [shape = 'u32[]', space=smem, size = 0x4, offset = 0x4, fixed_abs, tag = 'smem constant byte address 0x4 - core index']
  #allocation1 [shape = 'u32[144,128]{1,0:T(1,128)}', space=vmem, size = 0x12000, scoped, tag = 'internal scratch']
  %s0 = inlined_call_operand.vmem [shape: bf16[16,256], index: 0, kind: input, shape index: {}]
  %s1 = inlined_call_operand.vmem [shape: bf16[256,128], index: 1, kind: input, shape index: {}]
  %s2 = inlined_call_operand.vmem [shape: f32[1,128], index: 2, kind: input, shape index: {}]
  %s3 = inlined_call_operand.vmem [shape: f32[16,128], index: 3, kind: output, shape index: {}]
  %s4 = sld [smem:[#allocation0]]
  $region22: #{patch_embedding_forward.1} parent=0
    _
  %s6 = ssub.s32 1, %s4
  %s7 = scalar_select 0, %s6, %s4
  // Predicated region
  $region2: #{patch_embedding_forward.1} parent=0 // pred_check
    _
  $region3: #{patch_embedding_forward.1} parent=0 // pred_check_branch
    %9 = sbr.rel (0) target = $region5
  $region4: #{patch_embedding_forward.1} parent=0 // pred_region
    _
  $region5: #{patch_embedding_forward.1} parent=0 // pred_fallthru
    _
  // Predicated region
  $region6: #{patch_embedding_forward.1} parent=0 // pred_check
    _
  $region7: #{patch_embedding_forward.1} parent=0 // pred_check_branch
    %11 = sbr.rel (0) target = $region9
  $region8: #{patch_embedding_forward.1} parent=0 // pred_region
    _
  $region9: #{patch_embedding_forward.1} parent=0 // pred_fallthru
    _
  // Predicated region
  $region10: #{patch_embedding_forward.1} parent=0 // pred_check
    _
  $region11: #{patch_embedding_forward.1} parent=0 // pred_check_branch
    %13 = sbr.rel (0) target = $region13
  $region12: #{patch_embedding_forward.1} parent=0 // pred_region
    _
  $region13: #{patch_embedding_forward.1} parent=0 // pred_fallthru
    _
  %v15 = vld [vmem:[%s0] sm:$0xff]
  %v16 = vld [vmem:[%s0 + $0x8] sm:$0xff]
  %v17 = vld [vmem:[%s1] sm:$0xf]
  %v18 = vld [vmem:[%s1 + $0x4] sm:$0xf]
  %v19 = vld [vmem:[%s1 + $0x8] sm:$0xf]
  %v20 = vld [vmem:[%s1 + $0xc] sm:$0xf]
  %v21 = vld [vmem:[%s1 + $0x10] sm:$0xf]
  %v22 = vld [vmem:[%s1 + $0x14] sm:$0xf]
  %v23 = vld [vmem:[%s1 + $0x18] sm:$0xf]
  %v24 = vld [vmem:[%s1 + $0x1c] sm:$0xf]
  %v25 = vld [vmem:[%s1 + $0x20] sm:$0xf]
  %v26 = vld [vmem:[%s1 + $0x24] sm:$0xf]
  %v27 = vld [vmem:[%s1 + $0x28] sm:$0xf]
  %v28 = vld [vmem:[%s1 + $0x2c] sm:$0xf]
  %v29 = vld [vmem:[%s1 + $0x30] sm:$0xf]
  %v30 = vld [vmem:[%s1 + $0x34] sm:$0xf]
  %v31 = vld [vmem:[%s1 + $0x38] sm:$0xf]
  %v32 = vld [vmem:[%s1 + $0x3c] sm:$0xf]
  %v33 = vld [vmem:[%s1 + $0x40] sm:$0xf]
  %v34 = vld [vmem:[%s1 + $0x44] sm:$0xf]
  %v35 = vld [vmem:[%s1 + $0x48] sm:$0xf]
  %v36 = vld [vmem:[%s1 + $0x4c] sm:$0xf]
  %v37 = vld [vmem:[%s1 + $0x50] sm:$0xf]
  %v38 = vld [vmem:[%s1 + $0x54] sm:$0xf]
  %v39 = vld [vmem:[%s1 + $0x58] sm:$0xf]
  %v40 = vld [vmem:[%s1 + $0x5c] sm:$0xf]
  %v41 = vld [vmem:[%s1 + $0x60] sm:$0xf]
  %v42 = vld [vmem:[%s1 + $0x64] sm:$0xf]
  %v43 = vld [vmem:[%s1 + $0x68] sm:$0xf]
  %v44 = vld [vmem:[%s1 + $0x6c] sm:$0xf]
  %v45 = vld [vmem:[%s1 + $0x70] sm:$0xf]
  %v46 = vld [vmem:[%s1 + $0x74] sm:$0xf]
  %v47 = vld [vmem:[%s1 + $0x78] sm:$0xf]
  %v48 = vld [vmem:[%s1 + $0x7c] sm:$0xf]
  %v49 = vld [vmem:[%s2] sm:$0x1]
  %v51 = vlaneseq
  %v52 = vshrl.u32 %v51, 7
  %v53 = vsub.s32 0, %v52
  %v54 = vrot.slane %v49, %v53
  %v58 = vunpack.c.l.b16 %v15
  %v59 = vunpack.c.h.b16 %v15
  %v60 = vunpack.c.l.b16 %v16
  %v61 = vunpack.c.h.b16 %v16
  %v62 = vpack.c.b16 %v60, %v58
  %v63 = vpack.c.b16 %v61, %v59
  %v98 = vunpack.c.l.b16 %v17
  %v99 = vunpack.c.l.b16 %v18
  %v100 = vunpack.c.l.b16 %v19
  %v101 = vunpack.c.l.b16 %v20
  %v102 = vunpack.c.l.b16 %v21
  %v103 = vunpack.c.l.b16 %v22
  %v104 = vunpack.c.l.b16 %v23
  %v105 = vunpack.c.l.b16 %v24
  %v106 = vunpack.c.l.b16 %v25
  %v107 = vunpack.c.l.b16 %v26
  %v108 = vunpack.c.l.b16 %v27
  %v109 = vunpack.c.l.b16 %v28
  %v110 = vunpack.c.l.b16 %v29
  %v111 = vunpack.c.l.b16 %v30
  %v112 = vunpack.c.l.b16 %v31
  %v113 = vunpack.c.l.b16 %v32
  %v114 = vunpack.c.l.b16 %v33
  %v115 = vunpack.c.l.b16 %v34
  %v116 = vunpack.c.l.b16 %v35
  %v117 = vunpack.c.l.b16 %v36
  %v118 = vunpack.c.l.b16 %v37
  %v119 = vunpack.c.l.b16 %v38
  %v120 = vunpack.c.l.b16 %v39
  %v121 = vunpack.c.l.b16 %v40
  %v122 = vunpack.c.l.b16 %v41
  %v123 = vunpack.c.l.b16 %v42
  %v124 = vunpack.c.l.b16 %v43
  %v125 = vunpack.c.l.b16 %v44
  %v126 = vunpack.c.l.b16 %v45
  %v127 = vunpack.c.l.b16 %v46
  %v128 = vunpack.c.l.b16 %v47
  %v129 = vunpack.c.l.b16 %v48
  %v130 = vpack.c.b16 %v99, %v98
  %v131 = vpack.c.b16 %v101, %v100
  %v132 = vpack.c.b16 %v103, %v102
  %v133 = vpack.c.b16 %v105, %v104
  %v134 = vpack.c.b16 %v107, %v106
  %v135 = vpack.c.b16 %v109, %v108
  %v136 = vpack.c.b16 %v111, %v110
  %v137 = vpack.c.b16 %v113, %v112
  %v138 = vpack.c.b16 %v115, %v114
  %v139 = vpack.c.b16 %v117, %v116
  %v140 = vpack.c.b16 %v119, %v118
  %v141 = vpack.c.b16 %v121, %v120
  %v142 = vpack.c.b16 %v123, %v122
  %v143 = vpack.c.b16 %v125, %v124
  %v144 = vpack.c.b16 %v127, %v126
  %v145 = vpack.c.b16 %v129, %v128
  %162 = vmatprep.subr.bf16.mxu0 0
  %163 = vmatpush1.bf16.msra.mxu0 %v130
  %164 = vmatprep.subr.bf16.mxu0 0
  %165 = vmatpush1.bf16.msra.mxu0 %v131
  %166 = vmatprep.subr.bf16.mxu0 0
  %167 = vmatpush1.bf16.msra.mxu0 %v132
  %168 = vmatprep.subr.bf16.mxu0 0
  %169 = vmatpush1.bf16.msra.mxu0 %v133
  %170 = vmatprep.subr.bf16.mxu0 0
  %171 = vmatpush1.bf16.msra.mxu0 %v134
  %172 = vmatprep.subr.bf16.mxu0 0
  %173 = vmatpush1.bf16.msra.mxu0 %v135
  %174 = vmatprep.subr.bf16.mxu0 0
  %175 = vmatpush1.bf16.msra.mxu0 %v136
  %176 = vmatprep.subr.bf16.mxu0 0
  %177 = vmatpush1.bf16.msra.mxu0 %v137
  %178 = vmatprep.subr.bf16.mxu0 0
  %179 = vmatpush1.bf16.msra.mxu0 %v138
  %180 = vmatprep.subr.bf16.mxu0 0
  %181 = vmatpush1.bf16.msra.mxu0 %v139
  %182 = vmatprep.subr.bf16.mxu0 0
  %183 = vmatpush1.bf16.msra.mxu0 %v140
  %184 = vmatprep.subr.bf16.mxu0 0
  %185 = vmatpush1.bf16.msra.mxu0 %v141
  %186 = vmatprep.subr.bf16.mxu0 0
  %187 = vmatpush1.bf16.msra.mxu0 %v142
  %188 = vmatprep.subr.bf16.mxu0 0
  %189 = vmatpush1.bf16.msra.mxu0 %v143
  %190 = vmatprep.subr.bf16.mxu0 0
  %191 = vmatpush1.bf16.msra.mxu0 %v144
  %192 = vmatprep.subr.bf16.mxu0 0
  %193 = vmatpush1.bf16.msra.mxu0 %v145
  %194 = vmatprep.mubr.bf16.mxu0 %v63
  %195 = vmatmul.mubr.bf16.gmra.mrb[0].mxu0 %v62
  %v196 = vpop.f32.mrb[0].mxu0
  %v197 = vadd.f32 %v54, %v196
  %v198 = vpop.f32.mrb[0].mxu0
  %v199 = vpop.f32.mrb[0].mxu0
  %v200 = vadd.f32 %v54, %v199
  %v201 = vpop.f32.mrb[0].mxu0
  %202 = vdwg.mxu0
  %203 = vst [vmem:[%s3] sm:$0xff] %v197
  %204 = vst [vmem:[%s3 + $0x8] sm:$0xff] %v200
  // Predicated region
  $region14: #{patch_embedding_forward.1} parent=0 // pred_check
    _
  $region15: #{patch_embedding_forward.1} parent=0 // pred_check_branch
    %206 = sbr.rel (0) target = $region17
  $region16: #{patch_embedding_forward.1} parent=0 // pred_region
    _
  $region17: #{patch_embedding_forward.1} parent=0 // pred_fallthru
    _
  // Predicated region
  $region18: #{patch_embedding_forward.1} parent=0 // pred_check
    _
  $region19: #{patch_embedding_forward.1} parent=0 // pred_check_branch
    %208 = sbr.rel (0) target = $region21
  $region20: #{patch_embedding_forward.1} parent=0 // pred_region
    _
  $region21: #{patch_embedding_forward.1} parent=0 // pred_fallthru
    _

</llo_original>
